<compile_context>
chip_gen: v5e
topology: v5e:2x2
jax: 0.10.0
libtpu: 0.0.40
codegen_flags: <defaults>
</compile_context>

<pallas_src>
import functools
import math

import jax
import jax.numpy as jnp
from jax.experimental import pallas as pl
from jax.experimental.pallas import tpu as pltpu


# ----------------------------------------------------------------------------
# Constant "within-head lane broadcast" matrices.
#   E[q, c, f] = 1  iff  c == (f // d_k) * d_k + q
# so that (x @ E[q])[r, h*d_k + d] = x[r, h*d_k + q]  for every d.
# ----------------------------------------------------------------------------
def build_expansion(h, d_k):
    d_model = h * d_k
    c = jnp.arange(d_model)[None, :, None]      # contraction (source) index
    f = jnp.arange(d_model)[None, None, :]      # output feature index
    qq = jnp.arange(d_k)[:, None, None]
    src = (f // d_k) * d_k + qq                  # (d_k, 1, d_model)
    return (c == src).astype(jnp.float32)        # (d_k, d_model, d_model)


def _pick_tile(dim, pref):
    """Largest tile <= pref that divides dim and is a multiple of 8 (else dim/pref)."""
    if dim <= pref:
        return dim
    t = (pref // 8) * 8
    while t >= 8:
        if dim % t == 0:
            return t
        t -= 8
    return (pref // 8) * 8   # padded edge blocks are discarded on writeback


# ----------------------------------------------------------------------------
# Kernel 1: fused K/V projection + within-head expansion (computed ONCE per
# call, hoisted out of the attention grid).
#   kp = key @ Wk + bk ; ke = kp @ E_wide   (one wide matmul, N = d_k*d_model)
#   vp = val @ Wv + bv ; ve = vp @ E_wide
# ----------------------------------------------------------------------------
def _proj_expand_kernel(key_ref, val_ref, wk_ref, bk_ref, wv_ref, bv_ref,
                        ew_ref, ke_ref, ve_ref):
    f32 = jnp.float32
    ew = ew_ref[...]
    kp = jnp.dot(key_ref[...], wk_ref[...], preferred_element_type=f32) + bk_ref[...]
    vp = jnp.dot(val_ref[...], wv_ref[...], preferred_element_type=f32) + bv_ref[...]
    ke_ref[...] = jnp.dot(kp, ew, preferred_element_type=f32)
    ve_ref[...] = jnp.dot(vp, ew, preferred_element_type=f32)


def project_expand_pallas(key, value, wk, bk, wv, bv, e_wide):
    m, d_model = key.shape
    dkdm = e_wide.shape[1]
    tm = _pick_tile(m, 128)
    grid = (pl.cdiv(m, tm),)
    return pl.pallas_call(
        _proj_expand_kernel,
        out_shape=(jax.ShapeDtypeStruct((m, dkdm), jnp.float32),
                   jax.ShapeDtypeStruct((m, dkdm), jnp.float32)),
        grid=grid,
        in_specs=[
            pl.BlockSpec((tm, d_model), lambda i: (i, 0)),
            pl.BlockSpec((tm, d_model), lambda i: (i, 0)),
            pl.BlockSpec((d_model, d_model), lambda i: (0, 0)),
            pl.BlockSpec((1, d_model), lambda i: (0, 0)),
            pl.BlockSpec((d_model, d_model), lambda i: (0, 0)),
            pl.BlockSpec((1, d_model), lambda i: (0, 0)),
            pl.BlockSpec((d_model, dkdm), lambda i: (0, 0)),
        ],
        out_specs=(pl.BlockSpec((tm, dkdm), lambda i: (i, 0)),
                   pl.BlockSpec((tm, dkdm), lambda i: (i, 0))),
        compiler_params=pltpu.CompilerParams(
            dimension_semantics=("parallel",),
            vmem_limit_bytes=48 * 1024 * 1024),
    )(key, value, wk, bk.reshape(1, d_model), wv, bv.reshape(1, d_model), e_wide)


# ----------------------------------------------------------------------------
# Kernel 2: attention.  One grid step = (tn query rows) x (tm key rows).
# Everything stays lane-dense in d_model; the softmax reduction over q is a
# static length-d_k loop of lane-dense elementwise ops.
# ----------------------------------------------------------------------------
def _attn_kernel(q_ref, t_ref, wq_ref, bq_ref, wt_ref, bt_ref,
                 ke_ref, ve_ref, e_ref, wo_ref, bo_ref, o_ref,
                 *, h, d_k, tn, tm):
    f32 = jnp.float32
    d_model = h * d_k
    r = tn * tm
    scale = 1.0 / math.sqrt(d_k)

    # Query / time projections; softmax scale folded in once (not per q/pass).
    qp = (jnp.dot(q_ref[...], wq_ref[...], preferred_element_type=f32)
          + bq_ref[...]) * scale                                  # (tn, d_model)
    tp = (jnp.dot(t_ref[...], wt_ref[...], preferred_element_type=f32)
          + bt_ref[...]) * scale                                  # (tn, d_model)

    ke_all = ke_ref[...]                                          # (tm, d_k*d_model)
    ve_all = ve_ref[...]
    kqs = [ke_all[:, q * d_model:(q + 1) * d_model] for q in range(d_k)]
    vqs = [ve_all[:, q * d_model:(q + 1) * d_model] for q in range(d_k)]

    # ----------------------------- ctx attention ----------------------------
    # Exact max over q without a d_k-long max pass:
    #   max_q (qp * k_q) = qp * (kmax if qp >= 0 else kmin)
    kmx = kqs[0]
    kmn = kqs[0]
    for q in range(1, d_k):
        kmx = jnp.maximum(kmx, kqs[q])
        kmn = jnp.minimum(kmn, kqs[q])

    qb = jnp.broadcast_to(qp[:, None, :], (tn, tm, d_model))      # hoisted once
    mx1 = qb * jnp.where(qb >= 0.0, kmx[None, :, :], kmn[None, :, :])

    # Single accumulation pass, initialized with the q = 0 term (no zeros).
    p = jnp.exp(qb * kqs[0][None, :, :] - mx1)
    den1 = p
    num1 = p * vqs[0][None, :, :]
    for q in range(1, d_k):
        p = jnp.exp(qb * kqs[q][None, :, :] - mx1)
        den1 = den1 + p
        num1 = num1 + p * vqs[q][None, :, :]
    cv = (num1 / den1).reshape(r, d_model)                        # ctx_value

    # --------------------------- temporal attention -------------------------
    # Online softmax over q: each expansion cv @ E[q] is computed exactly once
    # and only O(1) expanded (r, d_model) tensors are live at any time.
    tb = jnp.broadcast_to(tp[:, None, :], (tn, tm, d_model)).reshape(r, d_model)

    cq = jnp.dot(cv, e_ref[0], preferred_element_type=f32)        # cve_0
    mx2 = tb * cq
    den2 = jnp.ones_like(mx2)                                     # exp(0)
    num2 = cq                                                     # exp(0) * cve_0
    for q in range(1, d_k):
        cq = jnp.dot(cv, e_ref[q], preferred_element_type=f32)
        s = tb * cq
        m_new = jnp.maximum(mx2, s)
        alpha = jnp.exp(mx2 - m_new)
        p = jnp.exp(s - m_new)
        den2 = alpha * den2 + p
        num2 = alpha * num2 + p * cq
        mx2 = m_new
    res = num2 / den2                                             # (r, d_model)

    # Output projection (linears[-1]) + store.
    out = jnp.dot(res, wo_ref[...], preferred_element_type=f32) + bo_ref[...]
    o_ref[...] = out.reshape(tn, tm, d_model)


def temp_ctx_attention_pallas(query, time, ke, ve, wq, bq, wt, bt, E3, wo, bo,
                              *, h, d_k):
    n, d_query = query.shape
    _, d_time = time.shape
    m = ke.shape[0]
    d_model = h * d_k
    dkdm = d_k * d_model

    tn = _pick_tile(n, 64)
    tm = _pick_tile(m, 128)
    # v7x megacore: prefer >= 2 parallel grid steps so both TensorCores work.
    if pl.cdiv(n, tn) * pl.cdiv(m, tm) < 2:
        if tn >= 16 and tn % 16 == 0:
            tn //= 2
        elif tm >= 16 and tm % 16 == 0:
            tm //= 2

    grid = (pl.cdiv(n, tn), pl.cdiv(m, tm))
    kernel = functools.partial(_attn_kernel, h=h, d_k=d_k, tn=tn, tm=tm)

    # Advisory cost hints (expansions for k/v are hoisted out of this call).
    flops = int(2 * n * m * d_model * d_model * (d_k + 1)
                + 14 * n * m * d_k * d_model
                + 2 * n * (d_query + d_time) * d_model * pl.cdiv(m, tm))
    transcendentals = int(3 * n * m * d_k * d_model)
    bytes_accessed = int(4 * (n * m * d_model
                              + n * (d_query + d_time)
                              + 2 * m * dkdm * pl.cdiv(n, tn)
                              + d_k * d_model * d_model
                              + (d_query + d_time + 2 * d_model + 4) * d_model))

    return pl.pallas_call(
        kernel,
        out_shape=jax.ShapeDtypeStruct((n, m, d_model), jnp.float32),
        grid=grid,
        in_specs=[
            pl.BlockSpec((tn, d_query), lambda i, j: (i, 0)),
            pl.BlockSpec((tn, d_time), lambda i, j: (i, 0)),
            pl.BlockSpec((d_query, d_model), lambda i, j: (0, 0)),
            pl.BlockSpec((1, d_model), lambda i, j: (0, 0)),
            pl.BlockSpec((d_time, d_model), lambda i, j: (0, 0)),
            pl.BlockSpec((1, d_model), lambda i, j: (0, 0)),
            pl.BlockSpec((tm, dkdm), lambda i, j: (j, 0)),
            pl.BlockSpec((tm, dkdm), lambda i, j: (j, 0)),
            pl.BlockSpec((d_k, d_model, d_model), lambda i, j: (0, 0, 0)),
            pl.BlockSpec((d_model, d_model), lambda i, j: (0, 0)),
            pl.BlockSpec((1, d_model), lambda i, j: (0, 0)),
        ],
        out_specs=pl.BlockSpec((tn, tm, d_model), lambda i, j: (i, j, 0)),
        compiler_params=pltpu.CompilerParams(
            dimension_semantics=("parallel", "parallel"),
            vmem_limit_bytes=48 * 1024 * 1024),
        cost_estimate=pl.CostEstimate(
            flops=flops, transcendentals=transcendentals,
            bytes_accessed=bytes_accessed),
    )(query, time, wq, bq.reshape(1, d_model), wt, bt.reshape(1, d_model),
      ke, ve, E3, wo, bo.reshape(1, d_model))


# ----------------------------------------------------------------------------
# Module wrapper (weights in (in, out) convention: y = x @ W + b).
# ----------------------------------------------------------------------------
class TempCtxAttentionNSPallas:
    def __init__(self, h, d_model, d_query, d_time, key):
        assert d_model % h == 0
        self.h = h
        self.d_model = d_model
        self.d_k = d_model // h

        def init_linear(k, d_in, d_out):
            kw, kb = jax.random.split(k)
            bound = 1.0 / math.sqrt(d_in)
            w = jax.random.uniform(kw, (d_in, d_out), jnp.float32, -bound, bound)
            b = jax.random.uniform(kb, (d_out,), jnp.float32, -bound, bound)
            return w, b

        ks = jax.random.split(key, 5)
        self.wq, self.bq = init_linear(ks[0], d_query, d_model)   # query_linear
        self.wt, self.bt = init_linear(ks[1], d_time, d_model)    # time_linear
        self.wk, self.bk = init_linear(ks[2], d_model, d_model)   # linears[0]
        self.wv, self.bv = init_linear(ks[3], d_model, d_model)   # linears[1]
        self.wo, self.bo = init_linear(ks[4], d_model, d_model)   # linears[-1]
        # TODO(synk): linears[2] of the cloned list is unused in forward (as in
        # the PyTorch module), so it is not materialized here.

        self.E = build_expansion(h, self.d_k)                     # (d_k, dm, dm)
        # E_wide[c, q*d_model + f] = E[q, c, f] -> one wide expansion matmul.
        self.E_wide = jnp.transpose(self.E, (1, 0, 2)).reshape(
            d_model, self.d_k * d_model)

    def __call__(self, query, key, value, time, mask=None):
        # mask is unused by the reference forward; dropout is eval-mode identity.
        ke, ve = project_expand_pallas(key, value, self.wk, self.bk,
                                       self.wv, self.bv, self.E_wide)
        return temp_ctx_attention_pallas(
            query, time, ke, ve,
            self.wq, self.bq, self.wt, self.bt, self.E, self.wo, self.bo,
            h=self.h, d_k=self.d_k)


# ----------------------------------------------------------------------------
# Pure-JAX reference (mirrors the PyTorch forward, eval mode).
# ----------------------------------------------------------------------------
def reference_forward(mod, query, key, value, time):
    n, m = query.shape[0], key.shape[0]
    h, d_k = mod.h, mod.d_k
    q = (query @ mod.wq + mod.bq).reshape(n, h, d_k)
    t = (time @ mod.wt + mod.bt).reshape(n, h, d_k)
    k = (key @ mod.wk + mod.bk).reshape(m, h, d_k)
    v = (value @ mod.wv + mod.bv).reshape(m, h, d_k)

    scale = math.sqrt(d_k)
    ctx_scores = jnp.einsum("nhd,mhq->nmhdq", q, k) / scale
    ctx_attn = jax.nn.softmax(ctx_scores, axis=-1)
    ctx_value = jnp.einsum("nmhdq,mhq->nmhd", ctx_attn, v)
    temp_scores = jnp.einsum("nhd,nmhq->nmhdq", t, ctx_value) / scale
    temp_attn = jax.nn.softmax(temp_scores, axis=-1)
    res = jnp.einsum("nmhdq,nmhq->nmhd", temp_attn, ctx_value)
    x = res.reshape(n, m, h * d_k)
    return x @ mod.wo + mod.bo


if __name__ == "__main__":
    h, d_model, d_query, d_time = 4, 32, 16, 16
    n, m = 8, 8

    root = jax.random.PRNGKey(0)
    k_params, k_q, k_k, k_v, k_t = jax.random.split(root, 5)

    mod = TempCtxAttentionNSPallas(h, d_model, d_query, d_time, k_params)

    query = jax.random.normal(k_q, (n, d_query), jnp.float32)
    key = jax.random.normal(k_k, (m, d_model), jnp.float32)
    value = jax.random.normal(k_v, (m, d_model), jnp.float32)
    time = jax.random.normal(k_t, (n, d_time), jnp.float32)

    out = jax.block_until_ready(mod(query, key, value, time))
    ref = jax.block_until_ready(reference_forward(mod, query, key, value, time))

    assert out.shape == (n, m, d_model)
    assert jnp.allclose(out, ref, atol=1e-4, rtol=1e-4), "mismatch vs reference"

    print("KERNEL_OK")
</pallas_src>

<mosaic_0001>
module attributes {stable_mosaic.version = 11 : i64} {
  func.func @_proj_expand_kernel(%arg0: i32, %arg1: memref<8x32xf32, #tpu.memory_space<vmem>>, %arg2: memref<8x32xf32, #tpu.memory_space<vmem>>, %arg3: memref<32x32xf32, #tpu.memory_space<vmem>>, %arg4: memref<1x32xf32, #tpu.memory_space<vmem>>, %arg5: memref<32x32xf32, #tpu.memory_space<vmem>>, %arg6: memref<1x32xf32, #tpu.memory_space<vmem>>, %arg7: memref<32x256xf32, #tpu.memory_space<vmem>>, %arg8: memref<8x256xf32, #tpu.memory_space<vmem>>, %arg9: memref<8x256xf32, #tpu.memory_space<vmem>>) attributes {dimension_semantics = [#tpu.dimension_semantics<parallel>], iteration_bounds = array<i64: 1>, scalar_prefetch = 0 : i64, scratch_operands = 0 : i64, tpu.core_type = #tpu.core_type<tc>, window_params = [{transform_indices = @transform_0, window_bounds = array<i64: 8, 32>}, {transform_indices = @transform_1, window_bounds = array<i64: 8, 32>}, {pipeline_mode = #tpu.pipeline_mode<synchronous>, transform_indices = @transform_2, window_bounds = array<i64: 32, 32>}, {pipeline_mode = #tpu.pipeline_mode<synchronous>, transform_indices = @transform_3, window_bounds = array<i64: 1, 32>}, {pipeline_mode = #tpu.pipeline_mode<synchronous>, transform_indices = @transform_4, window_bounds = array<i64: 32, 32>}, {pipeline_mode = #tpu.pipeline_mode<synchronous>, transform_indices = @transform_5, window_bounds = array<i64: 1, 32>}, {pipeline_mode = #tpu.pipeline_mode<synchronous>, transform_indices = @transform_6, window_bounds = array<i64: 32, 256>}, {transform_indices = @transform_7, window_bounds = array<i64: 8, 256>}, {transform_indices = @transform_8, window_bounds = array<i64: 8, 256>}]} {
    %c0 = arith.constant 0 : index
    %c0_0 = arith.constant 0 : index
    %0 = vector.load %arg7[%c0, %c0_0] : memref<32x256xf32, #tpu.memory_space<vmem>>, vector<32x256xf32>
    %c0_1 = arith.constant 0 : index
    %c0_2 = arith.constant 0 : index
    %1 = vector.load %arg1[%c0_1, %c0_2] : memref<8x32xf32, #tpu.memory_space<vmem>>, vector<8x32xf32>
    %c0_3 = arith.constant 0 : index
    %c0_4 = arith.constant 0 : index
    %2 = vector.load %arg3[%c0_3, %c0_4] : memref<32x32xf32, #tpu.memory_space<vmem>>, vector<32x32xf32>
    %cst = arith.constant dense<0.000000e+00> : vector<8x32xf32>
    %3 = tpu.matmul %1, %2, %cst {dimension_numbers = #tpu.dot_dimension_numbers<[1], [0], [0], [1], [0, 0, 1, 1], [], []>} : vector<8x32xf32>, vector<32x32xf32>, vector<8x32xf32> -> vector<8x32xf32>
    %c0_5 = arith.constant 0 : index
    %c0_6 = arith.constant 0 : index
    %4 = vector.load %arg4[%c0_5, %c0_6] : memref<1x32xf32, #tpu.memory_space<vmem>>, vector<1x32xf32>
    %5 = vector.broadcast %4 : vector<1x32xf32> to vector<8x32xf32>
    %6 = arith.addf %3, %5 : vector<8x32xf32>
    %c0_7 = arith.constant 0 : index
    %c0_8 = arith.constant 0 : index
    %7 = vector.load %arg2[%c0_7, %c0_8] : memref<8x32xf32, #tpu.memory_space<vmem>>, vector<8x32xf32>
    %c0_9 = arith.constant 0 : index
    %c0_10 = arith.constant 0 : index
    %8 = vector.load %arg5[%c0_9, %c0_10] : memref<32x32xf32, #tpu.memory_space<vmem>>, vector<32x32xf32>
    %cst_11 = arith.constant dense<0.000000e+00> : vector<8x32xf32>
    %9 = tpu.matmul %7, %8, %cst_11 {dimension_numbers = #tpu.dot_dimension_numbers<[1], [0], [0], [1], [0, 0, 1, 1], [], []>} : vector<8x32xf32>, vector<32x32xf32>, vector<8x32xf32> -> vector<8x32xf32>
    %c0_12 = arith.constant 0 : index
    %c0_13 = arith.constant 0 : index
    %10 = vector.load %arg6[%c0_12, %c0_13] : memref<1x32xf32, #tpu.memory_space<vmem>>, vector<1x32xf32>
    %11 = vector.broadcast %10 : vector<1x32xf32> to vector<8x32xf32>
    %12 = arith.addf %9, %11 : vector<8x32xf32>
    %cst_14 = arith.constant dense<0.000000e+00> : vector<8x256xf32>
    %13 = tpu.matmul %6, %0, %cst_14 {dimension_numbers = #tpu.dot_dimension_numbers<[1], [0], [0], [1], [0, 0, 1, 1], [], []>} : vector<8x32xf32>, vector<32x256xf32>, vector<8x256xf32> -> vector<8x256xf32>
    %c0_15 = arith.constant 0 : index
    %c0_16 = arith.constant 0 : index
    %14 = vector.load %arg8[%c0_15, %c0_16] : memref<8x256xf32, #tpu.memory_space<vmem>>, vector<8x256xf32>
    tpu.vector_store %arg8[%c0_15, %c0_16], %13 {strides = array<i32>} : memref<8x256xf32, #tpu.memory_space<vmem>>, vector<8x256xf32>,
    %cst_17 = arith.constant dense<0.000000e+00> : vector<8x256xf32>
    %15 = tpu.matmul %12, %0, %cst_17 {dimension_numbers = #tpu.dot_dimension_numbers<[1], [0], [0], [1], [0, 0, 1, 1], [], []>} : vector<8x32xf32>, vector<32x256xf32>, vector<8x256xf32> -> vector<8x256xf32>
    %c0_18 = arith.constant 0 : index
    %c0_19 = arith.constant 0 : index
    %16 = vector.load %arg9[%c0_18, %c0_19] : memref<8x256xf32, #tpu.memory_space<vmem>>, vector<8x256xf32>
    tpu.vector_store %arg9[%c0_18, %c0_19], %15 {strides = array<i32>} : memref<8x256xf32, #tpu.memory_space<vmem>>, vector<8x256xf32>,
    return
  }
  func.func @transform_0(%arg0: i32) -> (i32, i32) {
    %c0_i32 = arith.constant 0 : i32
    %c0_i32_0 = arith.constant 0 : i32
    return %arg0, %c0_i32 : i32, i32
  }
  func.func @transform_1(%arg0: i32) -> (i32, i32) {
    %c0_i32 = arith.constant 0 : i32
    %c0_i32_0 = arith.constant 0 : i32
    return %arg0, %c0_i32 : i32, i32
  }
  func.func @transform_2(%arg0: i32) -> (i32, i32) {
    %c0_i32 = arith.constant 0 : i32
    %c0_i32_0 = arith.constant 0 : i32
    %c0_i32_1 = arith.constant 0 : i32
    return %c0_i32, %c0_i32_0 : i32, i32
  }
  func.func @transform_3(%arg0: i32) -> (i32, i32) {
    %c0_i32 = arith.constant 0 : i32
    %c0_i32_0 = arith.constant 0 : i32
    %c0_i32_1 = arith.constant 0 : i32
    return %c0_i32, %c0_i32_0 : i32, i32
  }
  func.func @transform_4(%arg0: i32) -> (i32, i32) {
    %c0_i32 = arith.constant 0 : i32
    %c0_i32_0 = arith.constant 0 : i32
    %c0_i32_1 = arith.constant 0 : i32
    return %c0_i32, %c0_i32_0 : i32, i32
  }
  func.func @transform_5(%arg0: i32) -> (i32, i32) {
    %c0_i32 = arith.constant 0 : i32
    %c0_i32_0 = arith.constant 0 : i32
    %c0_i32_1 = arith.constant 0 : i32
    return %c0_i32, %c0_i32_0 : i32, i32
  }
  func.func @transform_6(%arg0: i32) -> (i32, i32) {
    %c0_i32 = arith.constant 0 : i32
    %c0_i32_0 = arith.constant 0 : i32
    %c0_i32_1 = arith.constant 0 : i32
    return %c0_i32, %c0_i32_0 : i32, i32
  }
  func.func @transform_7(%arg0: i32) -> (i32, i32) {
    %c0_i32 = arith.constant 0 : i32
    %c0_i32_0 = arith.constant 0 : i32
    return %arg0, %c0_i32 : i32, i32
  }
  func.func @transform_8(%arg0: i32) -> (i32, i32) {
    %c0_i32 = arith.constant 0 : i32
    %c0_i32_0 = arith.constant 0 : i32
    return %arg0, %c0_i32 : i32, i32
  }
}

</mosaic_0001>

<llo_original>
// kernel: tpu_custom_call.1
$region0: #{tpu_custom_call.1}
  #allocation0 [shape = 'u32[]', space=smem, size = 0x4, offset = 0x4, fixed_abs, tag = 'smem constant byte address 0x4 - core index']
  #allocation1 [shape = 'u32[72,128]{1,0:T(1,128)}', space=vmem, size = 0x9000, scoped, tag = 'internal scratch']
  %s0 = inlined_call_operand.hbm [shape: f32[8,32], index: 0, kind: input, shape index: {}]
  %s1 = inlined_call_operand.hbm [shape: f32[8,32], index: 1, kind: input, shape index: {}]
  %s2 = inlined_call_operand.hbm [shape: f32[32,32], index: 2, kind: input, shape index: {}]
  %s3 = inlined_call_operand.vmem [shape: f32[1,32], index: 3, kind: input, shape index: {}]
  %s4 = inlined_call_operand.hbm [shape: f32[32,32], index: 4, kind: input, shape index: {}]
  %s5 = inlined_call_operand.vmem [shape: f32[1,32], index: 5, kind: input, shape index: {}]
  %s6 = inlined_call_operand.hbm [shape: f32[32,256], index: 6, kind: input, shape index: {}]
  %s7 = inlined_call_operand.hbm [shape: f32[8,256], index: 7, kind: output, shape index: {0}]
  %s8 = inlined_call_operand.hbm [shape: f32[8,256], index: 8, kind: output, shape index: {1}]
  %9 = xla_tuple %s7, %s8
  %s10 = sld [smem:[#allocation0]]
  $region66: #{tpu_custom_call.1} parent=0
    _
  %s12 = ssub.s32 1, %s10
  %s13 = scalar_select 0, %s12, %s10
  $region1: #{tpu_custom_call.1} parent=0
    #allocation2 [shape = 'u8[4096]{0}', space=vmem, size = 0x1000, scoped, tag = 'input window, operand 0, single buffered']
    #allocation3 [shape = 's32[1]{0}', space=sflag, size = 0x4, scoped, tag = 'scoped memory for tpu_custom_call.1']
    #allocation4 [shape = 's32[1]{0}', space=sflag, size = 0x4, scoped, tag = 'scoped memory for tpu_custom_call.1']
    #allocation5 [shape = 'u8[4096]{0}', space=vmem, size = 0x1000, scoped, tag = 'input window, operand 1, single buffered']
    #allocation6 [shape = 's32[1]{0}', space=sflag, size = 0x4, scoped, tag = 'scoped memory for tpu_custom_call.1']
    #allocation7 [shape = 'u8[16384]{0}', space=vmem, size = 0x4000, scoped, tag = 'input window, operand 2, single buffered']
    #allocation8 [shape = 'u8[16384]{0}', space=vmem, size = 0x4000, scoped, tag = 'input window, operand 4, single buffered']
    #allocation9 [shape = 's32[1]{0}', space=sflag, size = 0x4, scoped, tag = 'scoped memory for tpu_custom_call.1']
    #allocation10 [shape = 'u8[32768]{0}', space=vmem, size = 0x8000, scoped, tag = 'input window, operand 6, single buffered']
    #allocation11 [shape = 'u8[8192]{0}', space=vmem, size = 0x2000, scoped, tag = 'output window, operand 0, single buffered']
    #allocation12 [shape = 'u8[8192]{0}', space=vmem, size = 0x2000, scoped, tag = 'output window, operand 1, single buffered']
    #allocation13 [shape = 's32[1]{0}', space=sflag, size = 0x4, scoped, tag = 'scoped memory for tpu_custom_call.1']
    %14 = vsyncpa [#allocation3], 0
    %15 = vsyncpa [#allocation6], 0
    %16 = vsyncpa [#allocation9], 0
    %17 = vsyncpa [#allocation4], 0
    %18 = vsyncpa [#allocation13], 0
    // Predicated region
    $region2: #{tpu_custom_call.1} parent=1 // pred_check
      _
    $region3: #{tpu_custom_call.1} parent=1 // pred_check_branch
      %20 = sbr.rel (0) target = $region5
    $region4: #{tpu_custom_call.1} parent=1 // pred_region
      %22 = vsyncadd [#allocation3], 0
      %s24 = sshll.u32 %s0, 4
      %s25 = int_to_ptr.hbm [resolvable:$true] %s24
      %s26 = sshll.u32 [#allocation2], 4
      %s27 = int_to_ptr.vmem [resolvable:$true] %s26
      %29 = dma.hbm_to_vmem [thread:$0]  %s25, 128, %s27, [#allocation3]
    $region5: #{tpu_custom_call.1} parent=1 // pred_fallthru
      _
    // Predicated region
    $region6: #{tpu_custom_call.1} parent=1 // pred_check
      _
    $region7: #{tpu_custom_call.1} parent=1 // pred_check_branch
      %31 = sbr.rel (0) target = $region9
    $region8: #{tpu_custom_call.1} parent=1 // pred_region
      %33 = vsyncadd [#allocation6], 0
      %s35 = sshll.u32 %s1, 4
      %s36 = int_to_ptr.hbm [resolvable:$true] %s35
      %s37 = sshll.u32 [#allocation5], 4
      %s38 = int_to_ptr.vmem [resolvable:$true] %s37
      %40 = dma.hbm_to_vmem [thread:$0]  %s36, 128, %s38, [#allocation6]
    $region9: #{tpu_custom_call.1} parent=1 // pred_fallthru
      _
    // Predicated region
    $region10: #{tpu_custom_call.1} parent=1 // pred_check
      _
    $region11: #{tpu_custom_call.1} parent=1 // pred_check_branch
      %42 = sbr.rel (0) target = $region13
    $region12: #{tpu_custom_call.1} parent=1 // pred_region
      %44 = vsyncadd [#allocation6], 0
      %s45 = sshll.u32 %s2, 4
      %s46 = int_to_ptr.hbm [resolvable:$true] %s45
      %s47 = sshll.u32 [#allocation7], 4
      %s48 = int_to_ptr.vmem [resolvable:$true] %s47
      %53 = dma.hbm_to_vmem [thread:$0]  %s46, 512, %s48, [#allocation6], 128, 128, 8
    $region13: #{tpu_custom_call.1} parent=1 // pred_fallthru
      _
    // Predicated region
    $region14: #{tpu_custom_call.1} parent=1 // pred_check
      _
    $region15: #{tpu_custom_call.1} parent=1 // pred_check_branch
      %55 = sbr.rel (0) target = $region17
    $region16: #{tpu_custom_call.1} parent=1 // pred_region
      _
    $region17: #{tpu_custom_call.1} parent=1 // pred_fallthru
      _
    // Predicated region
    $region18: #{tpu_custom_call.1} parent=1 // pred_check
      _
    $region19: #{tpu_custom_call.1} parent=1 // pred_check_branch
      %57 = sbr.rel (0) target = $region21
    $region20: #{tpu_custom_call.1} parent=1 // pred_region
      %59 = vsyncadd [#allocation9], 0
      %s60 = sshll.u32 %s4, 4
      %s61 = int_to_ptr.hbm [resolvable:$true] %s60
      %s62 = sshll.u32 [#allocation8], 4
      %s63 = int_to_ptr.vmem [resolvable:$true] %s62
      %68 = dma.hbm_to_vmem [thread:$0]  %s61, 512, %s63, [#allocation9], 128, 128, 8
    $region21: #{tpu_custom_call.1} parent=1 // pred_fallthru
      _
    // Predicated region
    $region22: #{tpu_custom_call.1} parent=1 // pred_check
      _
    $region23: #{tpu_custom_call.1} parent=1 // pred_check_branch
      %70 = sbr.rel (0) target = $region25
    $region24: #{tpu_custom_call.1} parent=1 // pred_region
      _
    $region25: #{tpu_custom_call.1} parent=1 // pred_fallthru
      _
    // Predicated region
    $region26: #{tpu_custom_call.1} parent=1 // pred_check
      _
    $region27: #{tpu_custom_call.1} parent=1 // pred_check_branch
      %72 = sbr.rel (0) target = $region29
    $region28: #{tpu_custom_call.1} parent=1 // pred_region
      %74 = vsyncadd [#allocation9], 0
      %s75 = sshll.u32 %s6, 4
      %s76 = int_to_ptr.hbm [resolvable:$true] %s75
      %s77 = sshll.u32 [#allocation10], 4
      %s78 = int_to_ptr.vmem [resolvable:$true] %s77
      %83 = dma.hbm_to_vmem [thread:$0]  %s76, 1024, %s78, [#allocation9], 256, 256, 16
    $region29: #{tpu_custom_call.1} parent=1 // pred_fallthru
      _
    // Predicated region
    $region30: #{tpu_custom_call.1} parent=1 // pred_check
      _
    $region31: #{tpu_custom_call.1} parent=1 // pred_check_branch
      %85 = sbr.rel (0) target = $region33
    $region32: #{tpu_custom_call.1} parent=1 // pred_region
      %87 = dma.done [#allocation3], 128
    $region33: #{tpu_custom_call.1} parent=1 // pred_fallthru
      _
    // Predicated region
    $region34: #{tpu_custom_call.1} parent=1 // pred_check
      _
    $region35: #{tpu_custom_call.1} parent=1 // pred_check_branch
      %89 = sbr.rel (0) target = $region37
    $region36: #{tpu_custom_call.1} parent=1 // pred_region
      %91 = dma.done [#allocation6], 128
    $region37: #{tpu_custom_call.1} parent=1 // pred_fallthru
      _
    // Predicated region
    $region38: #{tpu_custom_call.1} parent=1 // pred_check
      _
    $region39: #{tpu_custom_call.1} parent=1 // pred_check_branch
      %93 = sbr.rel (0) target = $region41
    $region40: #{tpu_custom_call.1} parent=1 // pred_region
      %95 = dma.done [#allocation6], 512
    $region41: #{tpu_custom_call.1} parent=1 // pred_fallthru
      _
    // Predicated region
    $region42: #{tpu_custom_call.1} parent=1 // pred_check
      _
    $region43: #{tpu_custom_call.1} parent=1 // pred_check_branch
      %97 = sbr.rel (0) target = $region45
    $region44: #{tpu_custom_call.1} parent=1 // pred_region
      %99 = dma.done [#allocation9], 512
    $region45: #{tpu_custom_call.1} parent=1 // pred_fallthru
      _
    // Predicated region
    $region46: #{tpu_custom_call.1} parent=1 // pred_check
      _
    $region47: #{tpu_custom_call.1} parent=1 // pred_check_branch
      %101 = sbr.rel (0) target = $region49
    $region48: #{tpu_custom_call.1} parent=1 // pred_region
      %103 = dma.done [#allocation9], 1024
    $region49: #{tpu_custom_call.1} parent=1 // pred_fallthru
      _
    %v104 = vld [vmem:[#allocation10] sm:$0xff]
    %v105 = vld [vmem:[#allocation10 + $0x8] sm:$0xff]
    %v106 = vld [vmem:[#allocation10 + $0x10] sm:$0xff]
    %v107 = vld [vmem:[#allocation10 + $0x18] sm:$0xff]
    %v108 = vld [vmem:[#allocation10 + $0x20] sm:$0xff]
    %v109 = vld [vmem:[#allocation10 + $0x28] sm:$0xff]
    %v110 = vld [vmem:[#allocation10 + $0x30] sm:$0xff]
    %v111 = vld [vmem:[#allocation10 + $0x38] sm:$0xff]
    %v112 = vld [vmem:[#allocation2] sm:$0xff]
    %v113 = vld [vmem:[#allocation7] sm:$0xff]
    %v114 = vld [vmem:[#allocation7 + $0x8] sm:$0xff]
    %v115 = vld [vmem:[#allocation7 + $0x10] sm:$0xff]
    %v116 = vld [vmem:[#allocation7 + $0x18] sm:$0xff]
    %v117 = vld [vmem:[%s3] sm:$0x1]
    %v119 = vperm.slane %v117, 0
    %vm121 = vcmask 261120
    %v123 = vsel %vm121, %v112, 0
    %125 = vmatpush.msra.mxu0 0.0
    %126 = vmatpush.msra.mxu0 0.0
    %127 = vmatpush.msra.mxu0 0.0
    %128 = vmatpush.msra.mxu0 0.0
    %129 = vmatpush.msra.mxu0 0.0
    %130 = vmatpush.msra.mxu0 0.0
    %131 = vmatpush.msra.mxu0 0.0
    %132 = vmatpush.msra.mxu0 0.0
    %133 = vmatpush.msra.mxu0 0.0
    %134 = vmatpush.msra.mxu0 0.0
    %135 = vmatpush.msra.mxu0 0.0
    %136 = vmatpush.msra.mxu0 0.0
    %137 = vmatpush.msra.mxu0 %v116
    %138 = vmatpush.msra.mxu0 %v115
    %139 = vmatpush.msra.mxu0 %v114
    %140 = vmatpush.msra.mxu0 %v113
    %141 = vmatmul.f32.gmra.mxu0 %v123
    %v142 = vpop.f32.mrf.mxu0
    %v143 = vadd.f32 %v119, %v142
    %144 = vdwg.mxu0
    %v145 = vld [vmem:[#allocation5] sm:$0xff]
    %v146 = vld [vmem:[#allocation8] sm:$0xff]
    %v147 = vld [vmem:[#allocation8 + $0x8] sm:$0xff]
    %v148 = vld [vmem:[#allocation8 + $0x10] sm:$0xff]
    %v149 = vld [vmem:[#allocation8 + $0x18] sm:$0xff]
    %v150 = vld [vmem:[%s5] sm:$0x1]
    %v152 = vperm.slane %v150, 0
    %v155 = vsel %vm121, %v145, 0
    %157 = vmatpush.msra.mxu0 0.0
    %158 = vmatpush.msra.mxu0 0.0
    %159 = vmatpush.msra.mxu0 0.0
    %160 = vmatpush.msra.mxu0 0.0
    %161 = vmatpush.msra.mxu0 0.0
    %162 = vmatpush.msra.mxu0 0.0
    %163 = vmatpush.msra.mxu0 0.0
    %164 = vmatpush.msra.mxu0 0.0
    %165 = vmatpush.msra.mxu0 0.0
    %166 = vmatpush.msra.mxu0 0.0
    %167 = vmatpush.msra.mxu0 0.0
    %168 = vmatpush.msra.mxu0 0.0
    %169 = vmatpush.msra.mxu0 %v149
    %170 = vmatpush.msra.mxu0 %v148
    %171 = vmatpush.msra.mxu0 %v147
    %172 = vmatpush.msra.mxu0 %v146
    %173 = vmatmul.f32.gmra.mxu0 %v155
    %v174 = vpop.f32.mrf.mxu0
    %v175 = vadd.f32 %v152, %v174
    %176 = vdwg.mxu0
    %v178 = vsel %vm121, %v143, 0
    %180 = vmatpush.msra.mxu0 0.0
    %181 = vmatpush.msra.mxu0 0.0
    %182 = vmatpush.msra.mxu0 0.0
    %183 = vmatpush.msra.mxu0 0.0
    %184 = vmatpush.msra.mxu0 0.0
    %185 = vmatpush.msra.mxu0 0.0
    %186 = vmatpush.msra.mxu0 0.0
    %187 = vmatpush.msra.mxu0 0.0
    %188 = vmatpush.msra.mxu0 0.0
    %189 = vmatpush.msra.mxu0 0.0
    %190 = vmatpush.msra.mxu0 0.0
    %191 = vmatpush.msra.mxu0 0.0
    %192 = vmatpush.msra.mxu0 %v110
    %193 = vmatpush.msra.mxu0 %v108
    %194 = vmatpush.msra.mxu0 %v106
    %195 = vmatpush.msra.mxu0 %v104
    %196 = vmatmul.f32.gmra.mxu0 %v178
    %v197 = vpop.f32.mrf.mxu0
    %v198 = vadd.f32 0.0, %v197
    %199 = vdwg.mxu0
    %200 = vmatpush.msra.mxu0 0.0
    %201 = vmatpush.msra.mxu0 0.0
    %202 = vmatpush.msra.mxu0 0.0
    %203 = vmatpush.msra.mxu0 0.0
    %204 = vmatpush.msra.mxu0 0.0
    %205 = vmatpush.msra.mxu0 0.0
    %206 = vmatpush.msra.mxu0 0.0
    %207 = vmatpush.msra.mxu0 0.0
    %208 = vmatpush.msra.mxu0 0.0
    %209 = vmatpush.msra.mxu0 0.0
    %210 = vmatpush.msra.mxu0 0.0
    %211 = vmatpush.msra.mxu0 0.0
    %212 = vmatpush.msra.mxu0 %v111
    %213 = vmatpush.msra.mxu0 %v109
    %214 = vmatpush.msra.mxu0 %v107
    %215 = vmatpush.msra.mxu0 %v105
    %216 = vmatmul.f32.gmra.mxu0 %v178
    %v217 = vpop.f32.mrf.mxu0
    %v218 = vadd.f32 0.0, %v217
    %219 = vdwg.mxu0
    %220 = vst [vmem:[#allocation11] sm:$0xff] %v198
    %221 = vst [vmem:[#allocation11 + $0x8] sm:$0xff] %v218
    %v223 = vsel %vm121, %v175, 0
    %225 = vmatpush.msra.mxu0 0.0
    %226 = vmatpush.msra.mxu0 0.0
    %227 = vmatpush.msra.mxu0 0.0
    %228 = vmatpush.msra.mxu0 0.0
    %229 = vmatpush.msra.mxu0 0.0
    %230 = vmatpush.msra.mxu0 0.0
    %231 = vmatpush.msra.mxu0 0.0
    %232 = vmatpush.msra.mxu0 0.0
    %233 = vmatpush.msra.mxu0 0.0
    %234 = vmatpush.msra.mxu0 0.0
    %235 = vmatpush.msra.mxu0 0.0
    %236 = vmatpush.msra.mxu0 0.0
    %237 = vmatpush.msra.mxu0 %v110
    %238 = vmatpush.msra.mxu0 %v108
    %239 = vmatpush.msra.mxu0 %v106
    %240 = vmatpush.msra.mxu0 %v104
    %241 = vmatmul.f32.gmra.mxu0 %v223
    %v242 = vpop.f32.mrf.mxu0
    %v243 = vadd.f32 0.0, %v242
    %244 = vdwg.mxu0
    %245 = vmatpush.msra.mxu0 0.0
    %246 = vmatpush.msra.mxu0 0.0
    %247 = vmatpush.msra.mxu0 0.0
    %248 = vmatpush.msra.mxu0 0.0
    %249 = vmatpush.msra.mxu0 0.0
    %250 = vmatpush.msra.mxu0 0.0
    %251 = vmatpush.msra.mxu0 0.0
    %252 = vmatpush.msra.mxu0 0.0
    %253 = vmatpush.msra.mxu0 0.0
    %254 = vmatpush.msra.mxu0 0.0
    %255 = vmatpush.msra.mxu0 0.0
    %256 = vmatpush.msra.mxu0 0.0
    %257 = vmatpush.msra.mxu0 %v111
    %258 = vmatpush.msra.mxu0 %v109
    %259 = vmatpush.msra.mxu0 %v107
    %260 = vmatpush.msra.mxu0 %v105
    %261 = vmatmul.f32.gmra.mxu0 %v223
    %v262 = vpop.f32.mrf.mxu0
    %v263 = vadd.f32 0.0, %v262
    %264 = vdwg.mxu0
    %265 = vst [vmem:[#allocation12] sm:$0xff] %v243
    %266 = vst [vmem:[#allocation12 + $0x8] sm:$0xff] %v263
    // Predicated region
    $region50: #{tpu_custom_call.1} parent=1 // pred_check
      _
    $region51: #{tpu_custom_call.1} parent=1 // pred_check_branch
      %268 = sbr.rel (0) target = $region53
    $region52: #{tpu_custom_call.1} parent=1 // pred_region
      %270 = vsyncadd [#allocation4], 0
      %s272 = sshll.u32 [#allocation11], 4
      %s273 = int_to_ptr.vmem [resolvable:$true] %s272
      %s274 = sshll.u32 %s7, 4
      %s275 = int_to_ptr.hbm [resolvable:$true] %s274
      %277 = dma.vmem_to_hbm [thread:$0]  %s273, 256, %s275, [#allocation4]
    $region53: #{tpu_custom_call.1} parent=1 // pred_fallthru
      _
    // Predicated region
    $region54: #{tpu_custom_call.1} parent=1 // pred_check
      _
    $region55: #{tpu_custom_call.1} parent=1 // pred_check_branch
      %279 = sbr.rel (0) target = $region57
    $region56: #{tpu_custom_call.1} parent=1 // pred_region
      %281 = vsyncadd [#allocation13], 0
      %s283 = sshll.u32 [#allocation12], 4
      %s284 = int_to_ptr.vmem [resolvable:$true] %s283
      %s285 = sshll.u32 %s8, 4
      %s286 = int_to_ptr.hbm [resolvable:$true] %s285
      %288 = dma.vmem_to_hbm [thread:$0]  %s284, 256, %s286, [#allocation13]
    $region57: #{tpu_custom_call.1} parent=1 // pred_fallthru
      _
    // Predicated region
    $region58: #{tpu_custom_call.1} parent=1 // pred_check
      _
    $region59: #{tpu_custom_call.1} parent=1 // pred_check_branch
      %290 = sbr.rel (0) target = $region61
    $region60: #{tpu_custom_call.1} parent=1 // pred_region
      %292 = dma.done [#allocation4], 256
    $region61: #{tpu_custom_call.1} parent=1 // pred_fallthru
      _
    // Predicated region
    $region62: #{tpu_custom_call.1} parent=1 // pred_check
      _
    $region63: #{tpu_custom_call.1} parent=1 // pred_check_branch
      %294 = sbr.rel (0) target = $region65
    $region64: #{tpu_custom_call.1} parent=1 // pred_region
      %296 = dma.done [#allocation13], 256
    $region65: #{tpu_custom_call.1} parent=1 // pred_fallthru
      _
    %297 = vsyncpa [#allocation3], 1
    %298 = vsyncpa [#allocation6], 1
    %299 = vsyncpa [#allocation9], 1
    %300 = vsyncpa [#allocation4], 1
    %301 = vsyncpa [#allocation13], 1

</llo_original>
